<compile_context>
chip_gen: v7x
topology: tpu7x:2x2x1
jax: 0.10.0
libtpu: 0.0.40
codegen_flags: <defaults>
</compile_context>

<pallas_src>
import functools

import jax
import jax.numpy as jnp
from jax.experimental import pallas as pl
from jax.experimental.pallas import tpu as pltpu


def _round_up(n, m):
    return ((n + m - 1) // m) * m


def _head_kernel_bias(x_ref, w1_ref, b1_ref, w2_ref, b2_ref, o_ref):
    # shared torso: h = relu(x @ W1 + b1)     (W1 pre-laid-out as (D_in, H_pad))
    h = jnp.dot(x_ref[...], w1_ref[...], preferred_element_type=jnp.float32)
    h = jnp.maximum(h + b1_ref[...], 0.0)           # (B, H_pad) + (1, H_pad)
    # head: out = h @ W2 + b2                 (W2 pre-laid-out as (H_pad, O_pad))
    out = jnp.dot(h, w2_ref[...], preferred_element_type=jnp.float32)
    o_ref[...] = (out + b2_ref[...]).astype(o_ref.dtype)


def _head_kernel_nobias(x_ref, w1_ref, b1_ref, w2_ref, o_ref):
    h = jnp.dot(x_ref[...], w1_ref[...], preferred_element_type=jnp.float32)
    h = jnp.maximum(h + b1_ref[...], 0.0)
    out = jnp.dot(h, w2_ref[...], preferred_element_type=jnp.float32)
    o_ref[...] = out.astype(o_ref.dtype)


def prepare_params(w1, b1, w2, b2, *, lane=128):
    """One-time layout conversion, done OUTSIDE the per-call path.

    * PyTorch stores Linear weight as (out, in); the kernel consumes (in, out)
      so both matmuls are plain row-major MXU ops (no in-kernel transpose).
    * Hidden dim H and output dim O are zero-padded to a multiple of 128 so
      the intermediate and the output stores are lane-dense (unmasked vst).
      Padded b1 entries / W2 rows+cols / b2 entries are exactly 0, so
      ReLU(0)=0 contributes nothing and out[:, :O] is unchanged.
    * If the head bias is identically 0 (the spec's constant init), b2 is
      dropped entirely (returned as None) so the kernel skips it.
    """
    w1 = jnp.asarray(w1, jnp.float32)
    b1 = jnp.asarray(b1, jnp.float32)
    w2 = jnp.asarray(w2, jnp.float32)
    b2 = jnp.asarray(b2, jnp.float32)

    H, D_in = w1.shape
    O = w2.shape[0]
    H_pad = _round_up(H, lane)
    O_pad = _round_up(O, lane)

    w1_t = jnp.zeros((D_in, H_pad), jnp.float32).at[:, :H].set(w1.T)
    b1_2d = jnp.zeros((1, H_pad), jnp.float32).at[:, :H].set(b1)
    w2_t = jnp.zeros((H_pad, O_pad), jnp.float32).at[:H, :O].set(w2.T)

    has_b2 = bool(jnp.any(b2 != 0))  # concrete params -> host-level check
    b2_2d = (jnp.zeros((1, O_pad), jnp.float32).at[:, :O].set(b2)
             if has_b2 else None)

    return w1_t, b1_2d, w2_t, b2_2d


@functools.partial(
    jax.jit, static_argnames=("outdim", "block_b", "gridless_cutoff"))
def head_forward(x, w1_t, b1_2d, w2_t, b2_2d=None, *, outdim,
                 block_b=4096, gridless_cutoff=1024):
    """x: (B, D_in); params already laid out by prepare_params()."""
    B, D_in = x.shape
    H_pad = w1_t.shape[1]
    O_pad = w2_t.shape[1]

    if b2_2d is None:
        kernel = _head_kernel_nobias
        operands = (x, w1_t, b1_2d, w2_t)
    else:
        kernel = _head_kernel_bias
        operands = (x, w1_t, b1_2d, w2_t, b2_2d)

    if B <= gridless_cutoff:
        # Small/medium batch: single VMEM block per operand, no grid, no
        # pipeline machinery (total footprint is a few hundred KiB at most).
        out = pl.pallas_call(
            kernel,
            out_shape=jax.ShapeDtypeStruct((B, O_pad), x.dtype),
            in_specs=[pl.BlockSpec(memory_space=pltpu.MemorySpace.VMEM)]
            * len(operands),
            out_specs=pl.BlockSpec(memory_space=pltpu.MemorySpace.VMEM),
        )(*operands)
    else:
        # Large batch: tile the batch dimension. Cap the tile so the grid has
        # >= 2 steps, letting the "parallel" batch axis shard across v7x's
        # two TensorCores (and both HBM paths). Weights/biases use constant
        # index maps -> they stay resident in VMEM across steps.
        bb = min(block_b, max(8, _round_up(pl.cdiv(B, 2), 8)))
        grid = (pl.cdiv(B, bb),)
        in_specs = [
            pl.BlockSpec((bb, D_in), lambda i: (i, 0)),      # x: streamed
            pl.BlockSpec((D_in, H_pad), lambda i: (0, 0)),   # W1: resident
            pl.BlockSpec((1, H_pad), lambda i: (0, 0)),      # b1: resident
            pl.BlockSpec((H_pad, O_pad), lambda i: (0, 0)),  # W2: resident
        ]
        if b2_2d is not None:
            in_specs.append(pl.BlockSpec((1, O_pad), lambda i: (0, 0)))
        out = pl.pallas_call(
            kernel,
            out_shape=jax.ShapeDtypeStruct((B, O_pad), x.dtype),
            grid=grid,
            in_specs=in_specs,
            out_specs=pl.BlockSpec((bb, O_pad), lambda i: (i, 0)),
            compiler_params=pltpu.CompilerParams(
                dimension_semantics=("parallel",)),
        )(*operands)

    # Padded columns are exact zeros; slice back to the module's output dim.
    return out[:, :outdim]


def head_reference(x, w1, b1, w2, b2):
    h = jnp.maximum(x @ w1.T + b1, 0.0)
    return h @ w2.T + b2


if __name__ == "__main__":
    # Shapes consistent with the module: in=32, shared_outdim=64, outdim=16.
    D_IN, SHARED_OUTDIM, OUTDIM = 32, 64, 16
    HEAD_BIAS_CONST = 0.0  # nn.init.constant_(self.head.bias, bias) with bias=0

    key = jax.random.PRNGKey(0)
    kx, kw1, kb1, kw2, kx2 = jax.random.split(key, 5)

    # TODO(synk): `shared` is an arbitrary user torso; instantiated here as the
    # canonical Linear(D_IN, SHARED_OUTDIM) + ReLU torso.
    w1 = jax.random.normal(kw1, (SHARED_OUTDIM, D_IN), dtype=jnp.float32) * 0.1
    b1 = jax.random.normal(kb1, (SHARED_OUTDIM,), dtype=jnp.float32) * 0.1
    w2 = jax.random.normal(kw2, (OUTDIM, SHARED_OUTDIM), dtype=jnp.float32) * 0.1
    b2 = jnp.full((OUTDIM,), HEAD_BIAS_CONST, dtype=jnp.float32)

    # One-time layout prep (transpose + lane-pad), outside the per-call path.
    params = prepare_params(w1, b1, w2, b2)

    # --- main case: small batch, gridless path, zero head bias (dropped) ---
    B = 128
    x = jax.random.normal(kx, (B, D_IN), dtype=jnp.float32)
    out = jax.block_until_ready(head_forward(x, *params, outdim=OUTDIM))
    ref = head_reference(x, w1, b1, w2, b2)
    assert out.shape == (B, OUTDIM), out.shape
    assert jnp.allclose(out, ref, atol=1e-5, rtol=1e-5), "mismatch (gridless)"

    # --- nonzero head bias: exercises the with-bias kernel variant ---
    b2_nz = jnp.full((OUTDIM,), 0.5, dtype=jnp.float32)
    params_nz = prepare_params(w1, b1, w2, b2_nz)
    out_nz = jax.block_until_ready(head_forward(x, *params_nz, outdim=OUTDIM))
    ref_nz = head_reference(x, w1, b1, w2, b2_nz)
    assert jnp.allclose(out_nz, ref_nz, atol=1e-5, rtol=1e-5), "mismatch (bias)"

    # --- large-batch case: batch-tiled "parallel" grid path (>=2 steps) ---
    B2 = 2048
    x2 = jax.random.normal(kx2, (B2, D_IN), dtype=jnp.float32)
    out2 = jax.block_until_ready(head_forward(x2, *params, outdim=OUTDIM))
    ref2 = head_reference(x2, w1, b1, w2, b2)
    assert out2.shape == (B2, OUTDIM), out2.shape
    assert jnp.allclose(out2, ref2, atol=1e-5, rtol=1e-5), "mismatch (tiled)"

    print("KERNEL_OK")
</pallas_src>

<mosaic_0001>
module attributes {stable_mosaic.version = 11 : i64} {
  func.func @_head_kernel_nobias(%arg0: memref<128x32xf32, #tpu.memory_space<vmem>>, %arg1: memref<32x128xf32, #tpu.memory_space<vmem>>, %arg2: memref<1x128xf32, #tpu.memory_space<vmem>>, %arg3: memref<128x128xf32, #tpu.memory_space<vmem>>, %arg4: memref<128x128xf32, #tpu.memory_space<vmem>>) attributes {dimension_semantics = [], scalar_prefetch = 0 : i64, scratch_operands = 0 : i64, tpu.core_type = #tpu.core_type<tc>} {
    %c0 = arith.constant 0 : index
    %c0_0 = arith.constant 0 : index
    %0 = vector.load %arg0[%c0, %c0_0] : memref<128x32xf32, #tpu.memory_space<vmem>>, vector<128x32xf32>
    %c0_1 = arith.constant 0 : index
    %c0_2 = arith.constant 0 : index
    %1 = vector.load %arg1[%c0_1, %c0_2] : memref<32x128xf32, #tpu.memory_space<vmem>>, vector<32x128xf32>
    %cst = arith.constant dense<0.000000e+00> : vector<128x128xf32>
    %2 = tpu.matmul %0, %1, %cst {dimension_numbers = #tpu.dot_dimension_numbers<[1], [0], [0], [1], [0, 0, 1, 1], [], []>} : vector<128x32xf32>, vector<32x128xf32>, vector<128x128xf32> -> vector<128x128xf32>
    %c0_3 = arith.constant 0 : index
    %c0_4 = arith.constant 0 : index
    %3 = vector.load %arg2[%c0_3, %c0_4] : memref<1x128xf32, #tpu.memory_space<vmem>>, vector<1x128xf32>
    %4 = vector.broadcast %3 : vector<1x128xf32> to vector<128x128xf32>
    %5 = arith.addf %2, %4 : vector<128x128xf32>
    %cst_5 = arith.constant 0.000000e+00 : f32
    %6 = vector.broadcast %cst_5 : f32 to vector<128x128xf32>
    %7 = arith.maximumf %5, %6 : vector<128x128xf32>
    %c0_6 = arith.constant 0 : index
    %c0_7 = arith.constant 0 : index
    %8 = vector.load %arg3[%c0_6, %c0_7] : memref<128x128xf32, #tpu.memory_space<vmem>>, vector<128x128xf32>
    %cst_8 = arith.constant dense<0.000000e+00> : vector<128x128xf32>
    %9 = tpu.matmul %7, %8, %cst_8 {dimension_numbers = #tpu.dot_dimension_numbers<[1], [0], [0], [1], [0, 0, 1, 1], [], []>} : vector<128x128xf32>, vector<128x128xf32>, vector<128x128xf32> -> vector<128x128xf32>
    %c0_9 = arith.constant 0 : index
    %c0_10 = arith.constant 0 : index
    %10 = vector.load %arg4[%c0_9, %c0_10] : memref<128x128xf32, #tpu.memory_space<vmem>>, vector<128x128xf32>
    tpu.vector_store %arg4[%c0_9, %c0_10], %9 {strides = array<i32>} : memref<128x128xf32, #tpu.memory_space<vmem>>, vector<128x128xf32>,
    return
  }
}

</mosaic_0001>

<llo_original>
// kernel: head_forward.1
$region0: #{head_forward.1}
  #allocation0 [shape = 'u32[]', space=smem, size = 0x4, offset = 0x4, fixed_abs, tag = 'smem constant byte address 0x4 - core index']
  #allocation1 [shape = 'u32[144,128]{1,0:T(1,128)}', space=vmem, size = 0x12000, scoped, tag = 'internal scratch']
  %s0 = inlined_call_operand.vmem [shape: f32[128,32], index: 0, kind: input, shape index: {}]
  %s1 = inlined_call_operand.vmem [shape: f32[32,128], index: 1, kind: input, shape index: {}]
  %s2 = inlined_call_operand.vmem [shape: f32[1,128], index: 2, kind: input, shape index: {}]
  %s3 = inlined_call_operand.vmem [shape: f32[128,128], index: 3, kind: input, shape index: {}]
  %s4 = inlined_call_operand.vmem [shape: f32[128,128], index: 4, kind: output, shape index: {}]
  %s5 = sld [smem:[#allocation0]]
  $region26: #{head_forward.1} parent=0
    _
  %s7 = ssub.s32 1, %s5
  %s8 = scalar_select 0, %s7, %s5
  // Predicated region
  $region2: #{head_forward.1} parent=0 // pred_check
    _
  $region3: #{head_forward.1} parent=0 // pred_check_branch
    %10 = sbr.rel (0) target = $region5
  $region4: #{head_forward.1} parent=0 // pred_region
    _
  $region5: #{head_forward.1} parent=0 // pred_fallthru
    _
  // Predicated region
  $region6: #{head_forward.1} parent=0 // pred_check
    _
  $region7: #{head_forward.1} parent=0 // pred_check_branch
    %12 = sbr.rel (0) target = $region9
  $region8: #{head_forward.1} parent=0 // pred_region
    _
  $region9: #{head_forward.1} parent=0 // pred_fallthru
    _
  // Predicated region
  $region10: #{head_forward.1} parent=0 // pred_check
    _
  $region11: #{head_forward.1} parent=0 // pred_check_branch
    %14 = sbr.rel (0) target = $region13
  $region12: #{head_forward.1} parent=0 // pred_region
    _
  $region13: #{head_forward.1} parent=0 // pred_fallthru
    _
  // Predicated region
  $region14: #{head_forward.1} parent=0 // pred_check
    _
  $region15: #{head_forward.1} parent=0 // pred_check_branch
    %16 = sbr.rel (0) target = $region17
  $region16: #{head_forward.1} parent=0 // pred_region
    _
  $region17: #{head_forward.1} parent=0 // pred_fallthru
    _
  %v17 = vld [vmem:[%s0] sm:$0xff]
  %v18 = vld [vmem:[%s0 + $0x8] sm:$0xff]
  %v19 = vld [vmem:[%s0 + $0x10] sm:$0xff]
  %v20 = vld [vmem:[%s0 + $0x18] sm:$0xff]
  %v21 = vld [vmem:[%s0 + $0x20] sm:$0xff]
  %v22 = vld [vmem:[%s0 + $0x28] sm:$0xff]
  %v23 = vld [vmem:[%s0 + $0x30] sm:$0xff]
  %v24 = vld [vmem:[%s0 + $0x38] sm:$0xff]
  %v25 = vld [vmem:[%s0 + $0x40] sm:$0xff]
  %v26 = vld [vmem:[%s0 + $0x48] sm:$0xff]
  %v27 = vld [vmem:[%s0 + $0x50] sm:$0xff]
  %v28 = vld [vmem:[%s0 + $0x58] sm:$0xff]
  %v29 = vld [vmem:[%s0 + $0x60] sm:$0xff]
  %v30 = vld [vmem:[%s0 + $0x68] sm:$0xff]
  %v31 = vld [vmem:[%s0 + $0x70] sm:$0xff]
  %v32 = vld [vmem:[%s0 + $0x78] sm:$0xff]
  %v33 = vld [vmem:[%s1] sm:$0xff]
  %v34 = vld [vmem:[%s1 + $0x8] sm:$0xff]
  %v35 = vld [vmem:[%s1 + $0x10] sm:$0xff]
  %v36 = vld [vmem:[%s1 + $0x18] sm:$0xff]
  %v37 = vld [vmem:[%s2] sm:$0x1]
  %v39 = vlaneseq
  %v40 = vshrl.u32 %v39, 7
  %v41 = vsub.s32 0, %v40
  %v42 = vrot.slane %v37, %v41
  %vm44 = vcmask 261120
  %v46 = vsel %vm44, %v17, 0
  %v49 = vsel %vm44, %v18, 0
  %v52 = vsel %vm44, %v19, 0
  %v55 = vsel %vm44, %v20, 0
  %v58 = vsel %vm44, %v21, 0
  %v61 = vsel %vm44, %v22, 0
  %v64 = vsel %vm44, %v23, 0
  %v67 = vsel %vm44, %v24, 0
  %v70 = vsel %vm44, %v25, 0
  %v73 = vsel %vm44, %v26, 0
  %v76 = vsel %vm44, %v27, 0
  %v79 = vsel %vm44, %v28, 0
  %v82 = vsel %vm44, %v29, 0
  %v85 = vsel %vm44, %v30, 0
  %v88 = vsel %vm44, %v31, 0
  %v91 = vsel %vm44, %v32, 0
  %93 = vmatprep.subr.mxu0 0.0
  %94 = vmatpush1.msra.mxu0 %v33
  %95 = vmatprep.subr.mxu0 0.0
  %96 = vmatpush1.msra.mxu0 %v34
  %97 = vmatprep.subr.mxu0 0.0
  %98 = vmatpush1.msra.mxu0 %v35
  %99 = vmatprep.subr.mxu0 0.0
  %100 = vmatpush1.msra.mxu0 %v36
  %101 = vmatprep.subr.mxu0 0.0
  %102 = vmatpush1.msra.mxu0 0.0
  %103 = vmatprep.subr.mxu0 0.0
  %104 = vmatpush1.msra.mxu0 0.0
  %105 = vmatprep.subr.mxu0 0.0
  %106 = vmatpush1.msra.mxu0 0.0
  %107 = vmatprep.subr.mxu0 0.0
  %108 = vmatpush1.msra.mxu0 0.0
  %109 = vmatprep.subr.mxu0 0.0
  %110 = vmatpush1.msra.mxu0 0.0
  %111 = vmatprep.subr.mxu0 0.0
  %112 = vmatpush1.msra.mxu0 0.0
  %113 = vmatprep.subr.mxu0 0.0
  %114 = vmatpush1.msra.mxu0 0.0
  %115 = vmatprep.subr.mxu0 0.0
  %116 = vmatpush1.msra.mxu0 0.0
  %117 = vmatprep.subr.mxu0 0.0
  %118 = vmatpush1.msra.mxu0 0.0
  %119 = vmatprep.subr.mxu0 0.0
  %120 = vmatpush1.msra.mxu0 0.0
  %121 = vmatprep.subr.mxu0 0.0
  %122 = vmatpush1.msra.mxu0 0.0
  %123 = vmatprep.subr.mxu0 0.0
  %124 = vmatpush1.msra.mxu0 0.0
  %125 = vmatprep.subr.mxu0 0.0
  %126 = vmatpush1.msra.mxu0 0.0
  %127 = vmatprep.subr.mxu0 0.0
  %128 = vmatpush1.msra.mxu0 0.0
  %129 = vmatprep.subr.mxu0 0.0
  %130 = vmatpush1.msra.mxu0 0.0
  %131 = vmatprep.subr.mxu0 0.0
  %132 = vmatpush1.msra.mxu0 0.0
  %133 = vmatprep.subr.mxu0 0.0
  %134 = vmatpush1.msra.mxu0 0.0
  %135 = vmatprep.subr.mxu0 0.0
  %136 = vmatpush1.msra.mxu0 0.0
  %137 = vmatprep.subr.mxu0 0.0
  %138 = vmatpush1.msra.mxu0 0.0
  %139 = vmatprep.subr.mxu0 0.0
  %140 = vmatpush1.msra.mxu0 0.0
  %141 = vmatprep.subr.mxu0 0.0
  %142 = vmatpush1.msra.mxu0 0.0
  %143 = vmatprep.subr.mxu0 0.0
  %144 = vmatpush1.msra.mxu0 0.0
  %145 = vmatprep.subr.mxu0 0.0
  %146 = vmatpush1.msra.mxu0 0.0
  %147 = vmatprep.subr.mxu0 0.0
  %148 = vmatpush1.msra.mxu0 0.0
  %149 = vmatprep.subr.mxu0 0.0
  %150 = vmatpush1.msra.mxu0 0.0
  %151 = vmatprep.subr.mxu0 0.0
  %152 = vmatpush1.msra.mxu0 0.0
  %153 = vmatprep.subr.mxu0 0.0
  %154 = vmatpush1.msra.mxu0 0.0
  %155 = vmatprep.subr.mxu0 0.0
  %156 = vmatpush1.msra.mxu0 0.0
  %157 = vmatprep.mubr.f32.mxu0 0.0
  %158 = vmatmul.mubr.f32.gmra.mrb[0].mxu0 %v46
  %v159 = vpop.f32.mrb[0].mxu0
  %v160 = vadd.f32 %v42, %v159
  %v161 = vpop.f32.mrb[0].mxu0
  %162 = vmatprep.mubr.f32.mxu0 0.0
  %163 = vmatmul.mubr.f32.gmra.mrb[0].mxu0 %v49
  %v164 = vpop.f32.mrb[0].mxu0
  %v165 = vadd.f32 %v42, %v164
  %v166 = vpop.f32.mrb[0].mxu0
  %167 = vmatprep.mubr.f32.mxu0 0.0
  %168 = vmatmul.mubr.f32.gmra.mrb[0].mxu0 %v52
  %v169 = vpop.f32.mrb[0].mxu0
  %v170 = vadd.f32 %v42, %v169
  %v171 = vpop.f32.mrb[0].mxu0
  %172 = vmatprep.mubr.f32.mxu0 0.0
  %173 = vmatmul.mubr.f32.gmra.mrb[0].mxu0 %v55
  %v174 = vpop.f32.mrb[0].mxu0
  %v175 = vadd.f32 %v42, %v174
  %v176 = vpop.f32.mrb[0].mxu0
  %177 = vmatprep.mubr.f32.mxu0 0.0
  %178 = vmatmul.mubr.f32.gmra.mrb[0].mxu0 %v58
  %v179 = vpop.f32.mrb[0].mxu0
  %v180 = vadd.f32 %v42, %v179
  %v181 = vpop.f32.mrb[0].mxu0
  %182 = vmatprep.mubr.f32.mxu0 0.0
  %183 = vmatmul.mubr.f32.gmra.mrb[0].mxu0 %v61
  %v184 = vpop.f32.mrb[0].mxu0
  %v185 = vadd.f32 %v42, %v184
  %v186 = vpop.f32.mrb[0].mxu0
  %187 = vmatprep.mubr.f32.mxu0 0.0
  %188 = vmatmul.mubr.f32.gmra.mrb[0].mxu0 %v64
  %v189 = vpop.f32.mrb[0].mxu0
  %v190 = vadd.f32 %v42, %v189
  %v191 = vpop.f32.mrb[0].mxu0
  %192 = vmatprep.mubr.f32.mxu0 0.0
  %193 = vmatmul.mubr.f32.gmra.mrb[0].mxu0 %v67
  %v194 = vpop.f32.mrb[0].mxu0
  %v195 = vadd.f32 %v42, %v194
  %v196 = vpop.f32.mrb[0].mxu0
  %197 = vmatprep.mubr.f32.mxu0 0.0
  %198 = vmatmul.mubr.f32.gmra.mrb[0].mxu0 %v70
  %v199 = vpop.f32.mrb[0].mxu0
  %v200 = vadd.f32 %v42, %v199
  %v201 = vpop.f32.mrb[0].mxu0
  %202 = vmatprep.mubr.f32.mxu0 0.0
  %203 = vmatmul.mubr.f32.gmra.mrb[0].mxu0 %v73
  %v204 = vpop.f32.mrb[0].mxu0
  %v205 = vadd.f32 %v42, %v204
  %v206 = vpop.f32.mrb[0].mxu0
  %207 = vmatprep.mubr.f32.mxu0 0.0
  %208 = vmatmul.mubr.f32.gmra.mrb[0].mxu0 %v76
  %v209 = vpop.f32.mrb[0].mxu0
  %v210 = vadd.f32 %v42, %v209
  %v211 = vpop.f32.mrb[0].mxu0
  %212 = vmatprep.mubr.f32.mxu0 0.0
  %213 = vmatmul.mubr.f32.gmra.mrb[0].mxu0 %v79
  %v214 = vpop.f32.mrb[0].mxu0
  %v215 = vadd.f32 %v42, %v214
  %v216 = vpop.f32.mrb[0].mxu0
  %217 = vmatprep.mubr.f32.mxu0 0.0
  %218 = vmatmul.mubr.f32.gmra.mrb[0].mxu0 %v82
  %v219 = vpop.f32.mrb[0].mxu0
  %v220 = vadd.f32 %v42, %v219
  %v221 = vpop.f32.mrb[0].mxu0
  %222 = vmatprep.mubr.f32.mxu0 0.0
  %223 = vmatmul.mubr.f32.gmra.mrb[0].mxu0 %v85
  %v224 = vpop.f32.mrb[0].mxu0
  %v225 = vadd.f32 %v42, %v224
  %v226 = vpop.f32.mrb[0].mxu0
  %227 = vmatprep.mubr.f32.mxu0 0.0
  %228 = vmatmul.mubr.f32.gmra.mrb[0].mxu0 %v88
  %v229 = vpop.f32.mrb[0].mxu0
  %v230 = vadd.f32 %v42, %v229
  %v231 = vpop.f32.mrb[0].mxu0
  %232 = vmatprep.mubr.f32.mxu0 0.0
  %233 = vmatmul.mubr.f32.gmra.mrb[0].mxu0 %v91
  %v234 = vpop.f32.mrb[0].mxu0
  %v235 = vadd.f32 %v42, %v234
  %v236 = vpop.f32.mrb[0].mxu0
  %237 = vdwg.mxu0
  %v238 = vmax.f32 %v160, 0.0
  %v239 = vmax.f32 %v165, 0.0
  %v240 = vmax.f32 %v170, 0.0
  %v241 = vmax.f32 %v175, 0.0
  %v242 = vmax.f32 %v180, 0.0
  %v243 = vmax.f32 %v185, 0.0
  %v244 = vmax.f32 %v190, 0.0
  %v245 = vmax.f32 %v195, 0.0
  %v246 = vmax.f32 %v200, 0.0
  %v247 = vmax.f32 %v205, 0.0
  %v248 = vmax.f32 %v210, 0.0
  %v249 = vmax.f32 %v215, 0.0
  %v250 = vmax.f32 %v220, 0.0
  %v251 = vmax.f32 %v225, 0.0
  %v252 = vmax.f32 %v230, 0.0
  %v253 = vmax.f32 %v235, 0.0
  %v254 = vld [vmem:[%s3] sm:$0xff]
  %v255 = vld [vmem:[%s3 + $0x8] sm:$0xff]
  %v256 = vld [vmem:[%s3 + $0x10] sm:$0xff]
  %v257 = vld [vmem:[%s3 + $0x18] sm:$0xff]
  %v258 = vld [vmem:[%s3 + $0x20] sm:$0xff]
  %v259 = vld [vmem:[%s3 + $0x28] sm:$0xff]
  %v260 = vld [vmem:[%s3 + $0x30] sm:$0xff]
  %v261 = vld [vmem:[%s3 + $0x38] sm:$0xff]
  %v262 = vld [vmem:[%s3 + $0x40] sm:$0xff]
  %v263 = vld [vmem:[%s3 + $0x48] sm:$0xff]
  %v264 = vld [vmem:[%s3 + $0x50] sm:$0xff]
  %v265 = vld [vmem:[%s3 + $0x58] sm:$0xff]
  %v266 = vld [vmem:[%s3 + $0x60] sm:$0xff]
  %v267 = vld [vmem:[%s3 + $0x68] sm:$0xff]
  %v268 = vld [vmem:[%s3 + $0x70] sm:$0xff]
  %v269 = vld [vmem:[%s3 + $0x78] sm:$0xff]
  %270 = vmatprep.subr.mxu0 0.0
  %271 = vmatpush1.msra.mxu0 %v254
  %272 = vmatprep.subr.mxu0 0.0
  %273 = vmatpush1.msra.mxu0 %v255
  %274 = vmatprep.subr.mxu0 0.0
  %275 = vmatpush1.msra.mxu0 %v256
  %276 = vmatprep.subr.mxu0 0.0
  %277 = vmatpush1.msra.mxu0 %v257
  %278 = vmatprep.subr.mxu0 0.0
  %279 = vmatpush1.msra.mxu0 %v258
  %280 = vmatprep.subr.mxu0 0.0
  %281 = vmatpush1.msra.mxu0 %v259
  %282 = vmatprep.subr.mxu0 0.0
  %283 = vmatpush1.msra.mxu0 %v260
  %284 = vmatprep.subr.mxu0 0.0
  %285 = vmatpush1.msra.mxu0 %v261
  %286 = vmatprep.subr.mxu0 0.0
  %287 = vmatpush1.msra.mxu0 %v262
  %288 = vmatprep.subr.mxu0 0.0
  %289 = vmatpush1.msra.mxu0 %v263
  %290 = vmatprep.subr.mxu0 0.0
  %291 = vmatpush1.msra.mxu0 %v264
  %292 = vmatprep.subr.mxu0 0.0
  %293 = vmatpush1.msra.mxu0 %v265
  %294 = vmatprep.subr.mxu0 0.0
  %295 = vmatpush1.msra.mxu0 %v266
  %296 = vmatprep.subr.mxu0 0.0
  %297 = vmatpush1.msra.mxu0 %v267
  %298 = vmatprep.subr.mxu0 0.0
  %299 = vmatpush1.msra.mxu0 %v268
  %300 = vmatprep.subr.mxu0 0.0
  %301 = vmatpush1.msra.mxu0 %v269
  %302 = vmatprep.subr.mxu0 0.0
  %303 = vmatpush1.msra.mxu0 0.0
  %304 = vmatprep.subr.mxu0 0.0
  %305 = vmatpush1.msra.mxu0 0.0
  %306 = vmatprep.subr.mxu0 0.0
  %307 = vmatpush1.msra.mxu0 0.0
  %308 = vmatprep.subr.mxu0 0.0
  %309 = vmatpush1.msra.mxu0 0.0
  %310 = vmatprep.subr.mxu0 0.0
  %311 = vmatpush1.msra.mxu0 0.0
  %312 = vmatprep.subr.mxu0 0.0
  %313 = vmatpush1.msra.mxu0 0.0
  %314 = vmatprep.subr.mxu0 0.0
  %315 = vmatpush1.msra.mxu0 0.0
  %316 = vmatprep.subr.mxu0 0.0
  %317 = vmatpush1.msra.mxu0 0.0
  %318 = vmatprep.subr.mxu0 0.0
  %319 = vmatpush1.msra.mxu0 0.0
  %320 = vmatprep.subr.mxu0 0.0
  %321 = vmatpush1.msra.mxu0 0.0
  %322 = vmatprep.subr.mxu0 0.0
  %323 = vmatpush1.msra.mxu0 0.0
  %324 = vmatprep.subr.mxu0 0.0
  %325 = vmatpush1.msra.mxu0 0.0
  %326 = vmatprep.subr.mxu0 0.0
  %327 = vmatpush1.msra.mxu0 0.0
  %328 = vmatprep.subr.mxu0 0.0
  %329 = vmatpush1.msra.mxu0 0.0
  %330 = vmatprep.subr.mxu0 0.0
  %331 = vmatpush1.msra.mxu0 0.0
  %332 = vmatprep.subr.mxu0 0.0
  %333 = vmatpush1.msra.mxu0 0.0
  %334 = vmatprep.mubr.f32.mxu0 0.0
  %335 = vmatmul.mubr.f32.gmra.mrb[0].mxu0 %v238
  %v336 = vpop.f32.mrb[0].mxu0
  %v337 = vadd.f32 0.0, %v336
  %v338 = vpop.f32.mrb[0].mxu0
  %339 = vmatprep.mubr.f32.mxu0 0.0
  %340 = vmatmul.mubr.f32.gmra.mrb[0].mxu0 %v239
  %v341 = vpop.f32.mrb[0].mxu0
  %v342 = vadd.f32 0.0, %v341
  %v343 = vpop.f32.mrb[0].mxu0
  %344 = vmatprep.mubr.f32.mxu0 0.0
  %345 = vmatmul.mubr.f32.gmra.mrb[0].mxu0 %v240
  %v346 = vpop.f32.mrb[0].mxu0
  %v347 = vadd.f32 0.0, %v346
  %v348 = vpop.f32.mrb[0].mxu0
  %349 = vmatprep.mubr.f32.mxu0 0.0
  %350 = vmatmul.mubr.f32.gmra.mrb[0].mxu0 %v241
  %v351 = vpop.f32.mrb[0].mxu0
  %v352 = vadd.f32 0.0, %v351
  %v353 = vpop.f32.mrb[0].mxu0
  %354 = vmatprep.mubr.f32.mxu0 0.0
  %355 = vmatmul.mubr.f32.gmra.mrb[0].mxu0 %v242
  %v356 = vpop.f32.mrb[0].mxu0
  %v357 = vadd.f32 0.0, %v356
  %v358 = vpop.f32.mrb[0].mxu0
  %359 = vmatprep.mubr.f32.mxu0 0.0
  %360 = vmatmul.mubr.f32.gmra.mrb[0].mxu0 %v243
  %v361 = vpop.f32.mrb[0].mxu0
  %v362 = vadd.f32 0.0, %v361
  %v363 = vpop.f32.mrb[0].mxu0
  %364 = vmatprep.mubr.f32.mxu0 0.0
  %365 = vmatmul.mubr.f32.gmra.mrb[0].mxu0 %v244
  %v366 = vpop.f32.mrb[0].mxu0
  %v367 = vadd.f32 0.0, %v366
  %v368 = vpop.f32.mrb[0].mxu0
  %369 = vmatprep.mubr.f32.mxu0 0.0
  %370 = vmatmul.mubr.f32.gmra.mrb[0].mxu0 %v245
  %v371 = vpop.f32.mrb[0].mxu0
  %v372 = vadd.f32 0.0, %v371
  %v373 = vpop.f32.mrb[0].mxu0
  %374 = vmatprep.mubr.f32.mxu0 0.0
  %375 = vmatmul.mubr.f32.gmra.mrb[0].mxu0 %v246
  %v376 = vpop.f32.mrb[0].mxu0
  %v377 = vadd.f32 0.0, %v376
  %v378 = vpop.f32.mrb[0].mxu0
  %379 = vmatprep.mubr.f32.mxu0 0.0
  %380 = vmatmul.mubr.f32.gmra.mrb[0].mxu0 %v247
  %v381 = vpop.f32.mrb[0].mxu0
  %v382 = vadd.f32 0.0, %v381
  %v383 = vpop.f32.mrb[0].mxu0
  %384 = vmatprep.mubr.f32.mxu0 0.0
  %385 = vmatmul.mubr.f32.gmra.mrb[0].mxu0 %v248
  %v386 = vpop.f32.mrb[0].mxu0
  %v387 = vadd.f32 0.0, %v386
  %v388 = vpop.f32.mrb[0].mxu0
  %389 = vmatprep.mubr.f32.mxu0 0.0
  %390 = vmatmul.mubr.f32.gmra.mrb[0].mxu0 %v249
  %v391 = vpop.f32.mrb[0].mxu0
  %v392 = vadd.f32 0.0, %v391
  %v393 = vpop.f32.mrb[0].mxu0
  %394 = vmatprep.mubr.f32.mxu0 0.0
  %395 = vmatmul.mubr.f32.gmra.mrb[0].mxu0 %v250
  %v396 = vpop.f32.mrb[0].mxu0
  %v397 = vadd.f32 0.0, %v396
  %v398 = vpop.f32.mrb[0].mxu0
  %399 = vmatprep.mubr.f32.mxu0 0.0
  %400 = vmatmul.mubr.f32.gmra.mrb[0].mxu0 %v251
  %v401 = vpop.f32.mrb[0].mxu0
  %v402 = vadd.f32 0.0, %v401
  %v403 = vpop.f32.mrb[0].mxu0
  %404 = vmatprep.mubr.f32.mxu0 0.0
  %405 = vmatmul.mubr.f32.gmra.mrb[0].mxu0 %v252
  %v406 = vpop.f32.mrb[0].mxu0
  %v407 = vadd.f32 0.0, %v406
  %v408 = vpop.f32.mrb[0].mxu0
  %409 = vmatprep.mubr.f32.mxu0 0.0
  %410 = vmatmul.mubr.f32.gmra.mrb[0].mxu0 %v253
  %v411 = vpop.f32.mrb[0].mxu0
  %v412 = vadd.f32 0.0, %v411
  %v413 = vpop.f32.mrb[0].mxu0
  %414 = vdwg.mxu0
  %415 = vst [vmem:[%s4] sm:$0xff] %v337
  %416 = vst [vmem:[%s4 + $0x8] sm:$0xff] %v342
  %417 = vst [vmem:[%s4 + $0x10] sm:$0xff] %v347
  %418 = vst [vmem:[%s4 + $0x18] sm:$0xff] %v352
  %419 = vst [vmem:[%s4 + $0x20] sm:$0xff] %v357
  %420 = vst [vmem:[%s4 + $0x28] sm:$0xff] %v362
  %421 = vst [vmem:[%s4 + $0x30] sm:$0xff] %v367
  %422 = vst [vmem:[%s4 + $0x38] sm:$0xff] %v372
  %423 = vst [vmem:[%s4 + $0x40] sm:$0xff] %v377
  %424 = vst [vmem:[%s4 + $0x48] sm:$0xff] %v382
  %425 = vst [vmem:[%s4 + $0x50] sm:$0xff] %v387
  %426 = vst [vmem:[%s4 + $0x58] sm:$0xff] %v392
  %427 = vst [vmem:[%s4 + $0x60] sm:$0xff] %v397
  %428 = vst [vmem:[%s4 + $0x68] sm:$0xff] %v402
  %429 = vst [vmem:[%s4 + $0x70] sm:$0xff] %v407
  %430 = vst [vmem:[%s4 + $0x78] sm:$0xff] %v412
  // Predicated region
  $region18: #{head_forward.1} parent=0 // pred_check
    _
  $region19: #{head_forward.1} parent=0 // pred_check_branch
    %432 = sbr.rel (0) target = $region21
  $region20: #{head_forward.1} parent=0 // pred_region
    _
  $region21: #{head_forward.1} parent=0 // pred_fallthru
    _
  // Predicated region
  $region22: #{head_forward.1} parent=0 // pred_check
    _
  $region23: #{head_forward.1} parent=0 // pred_check_branch
    %434 = sbr.rel (0) target = $region25
  $region24: #{head_forward.1} parent=0 // pred_region
    _
  $region25: #{head_forward.1} parent=0 // pred_fallthru
    _

</llo_original>
